<compile_context>
chip_gen: v7x
topology: tpu7x:2x2x1
jax: 0.10.0
libtpu: 0.0.40
codegen_flags: <defaults>
</compile_context>

<pallas_src>
import functools

import jax
import jax.numpy as jnp
from jax import lax
from jax.experimental import pallas as pl
from jax.experimental.pallas import tpu as pltpu

LANES = 128
SUBLANES = 8
ROW_ALIGN = 32          # sublane-packing friendly for f32/bf16/int8/fp8 inputs
MAX_TILE_ROWS = 8192    # 8192 rows * 128 lanes * 4 B = 4 MiB per f32 input block
REDUCE_FANIN = 8        # fan-in of the first reduction stage (ILP across VALU)


def _stable_bce(x, y):
    # PyTorch's numerically stable formulation:
    #   max(x, 0) - x*y + log1p(exp(-|x|))
    return jnp.maximum(x, 0.0) - x * y + jnp.log1p(jnp.exp(-jnp.abs(x)))


def _reduce_tile(loss_f32):
    """Reduce a (tile_rows, 128) f32 tile to a single (8, 128) partial."""
    rows = loss_f32.shape[0]
    if rows % SUBLANES != 0:
        # Tiny single-block case (block == whole array, rows not sublane
        # aligned): collapse to one row and spread it evenly over the 8
        # sublanes; the /8 and the later 8-way re-sum are exact in f32.
        row = jnp.sum(loss_f32, axis=0, keepdims=True) * (1.0 / SUBLANES)
        return jnp.broadcast_to(row, (SUBLANES, LANES))
    k = rows // SUBLANES
    out = loss_f32.reshape(k, SUBLANES, LANES)
    fanin = REDUCE_FANIN
    while fanin > 1 and (k < fanin or k % fanin != 0):
        fanin //= 2
    if fanin > 1:
        # Stage 1: k//fanin independent partial sums (ILP across VALU slots);
        # reshape only regroups whole (8,128) tiles -> no layout shuffle.
        out = out.reshape(k // fanin, fanin, SUBLANES, LANES).sum(axis=1)
    # Stage 2: short serial tail.
    return out.sum(axis=0)


def _bce_partial_kernel(x_ref, y_ref, out_ref, *, total_rows, compute_dtype):
    """Per-block partial sum of the stable BCE-with-logits elementwise loss."""
    x = x_ref[...].astype(compute_dtype)
    y = y_ref[...].astype(compute_dtype)
    loss = _stable_bce(x, y).astype(jnp.float32)      # accumulate in f32

    tile_rows = x_ref.shape[0]
    if total_rows % tile_rows == 0:
        # Every block is fully valid: no masking anywhere.
        out_ref[0] = _reduce_tile(loss)
    else:
        i = pl.program_id(0)
        last = pl.num_programs(0) - 1

        @pl.when(i != last)
        def _():
            out_ref[0] = _reduce_tile(loss)

        @pl.when(i == last)
        def _():
            # Rows past the end of the slab hold unspecified data; mask them
            # (row-granular iota compare; no global element-index overflow).
            valid = total_rows - i * tile_rows
            row_ids = lax.broadcasted_iota(jnp.int32, loss.shape, 0)
            out_ref[0] = _reduce_tile(jnp.where(row_ids < valid, loss, 0.0))


def bce_with_logits_loss(logits: jax.Array, labels: jax.Array) -> dict:
    """Mean-reduced BCEWithLogitsLoss over all elements (PyTorch semantics)."""
    assert logits.shape == labels.shape, "logits/labels must have the same shape"
    n = logits.size
    assert n > 0, "empty input"

    # PyTorch does labels.float(); only pay that cast for non-float labels,
    # otherwise stream native dtypes and cast in-kernel (free vs. DMA).
    if not jnp.issubdtype(labels.dtype, jnp.floating):
        labels = labels.astype(jnp.float32)

    x = jnp.ravel(logits)
    y = jnp.ravel(labels)

    # bf16 inputs: elementwise math (incl. exp/log1p on the EUP) in bf16
    # (v6e/v7x bf16 VPU/EUP); the reduction is always f32.  f32 stays f32.
    compute_dtype = (jnp.bfloat16
                     if (x.dtype == jnp.bfloat16 and y.dtype == jnp.bfloat16)
                     else jnp.float32)

    # Lane-dense slab [rows, 128].  Only a <=127-element pad when n is not a
    # multiple of 128 (its exact contribution is removed analytically below);
    # row/tile raggedness is handled in-kernel with NO full-array copy.
    pad_elems = (-n) % LANES
    if pad_elems:
        x = jnp.pad(x, (0, pad_elems))
        y = jnp.pad(y, (0, pad_elems))
    rows = (n + pad_elems) // LANES
    x2 = x.reshape(rows, LANES)
    y2 = y.reshape(rows, LANES)

    # Balanced tiling: pick the block count first, then even, aligned tiles.
    nb_target = pl.cdiv(rows, MAX_TILE_ROWS)
    tile_rows = pl.cdiv(pl.cdiv(rows, nb_target), ROW_ALIGN) * ROW_ALIGN
    if tile_rows >= rows:
        tile_rows = rows            # single block == whole array (no masking)
    num_blocks = pl.cdiv(rows, tile_rows)

    # VMEM budget: double-buffered native-dtype input blocks + in-kernel f32
    # temporaries (x, y, loss) + headroom; valid on v5e (raise past the 16 MiB
    # default scoped limit) and safely below v7x's 64 MiB physical VMEM.
    in_block_bytes = tile_rows * LANES * (x2.dtype.itemsize + y2.dtype.itemsize)
    f32_tile_bytes = tile_rows * LANES * 4
    vmem_limit = int(min(max(2 * in_block_bytes + 3 * f32_tile_bytes + (4 << 20),
                             16 << 20), 48 << 20))

    cost = pl.CostEstimate(
        flops=6 * n,
        transcendentals=2 * n,
        bytes_accessed=int(n * (x2.dtype.itemsize + y2.dtype.itemsize)
                           + num_blocks * SUBLANES * LANES * 4),
    )

    kernel = functools.partial(_bce_partial_kernel,
                               total_rows=rows, compute_dtype=compute_dtype)

    partials = pl.pallas_call(
        kernel,
        out_shape=jax.ShapeDtypeStruct((num_blocks, SUBLANES, LANES), jnp.float32),
        grid_spec=pltpu.PrefetchScalarGridSpec(
            num_scalar_prefetch=0,
            grid=(num_blocks,),
            in_specs=[
                pl.BlockSpec((tile_rows, LANES), lambda i: (i, 0)),
                pl.BlockSpec((tile_rows, LANES), lambda i: (i, 0)),
            ],
            out_specs=pl.BlockSpec((1, SUBLANES, LANES), lambda i: (i, 0, 0)),
        ),
        compiler_params=pltpu.CompilerParams(
            # Independent blocks: lets both TensorCores stream on v7x.
            # TODO(synk): verify in an xprof trace that this axis shards across
            # both v7x TCs; if not, switch to pltpu.CORE_PARALLEL.
            dimension_semantics=("parallel",),
            vmem_limit_bytes=vmem_limit,
        ),
        cost_estimate=cost,
    )(x2, y2)

    total = jnp.sum(partials, dtype=jnp.float32)
    if pad_elems:
        # Each zero-padded element (x=0, y=0) contributes exactly
        # log1p(exp(0)) as computed in compute_dtype; subtract the same amount.
        pad_unit = jnp.log1p(jnp.exp(-jnp.abs(jnp.zeros((), compute_dtype))))
        total = total - jnp.float32(pad_elems) * pad_unit.astype(jnp.float32)
    loss = total / jnp.float32(n)
    return {"loss": loss}


if __name__ == "__main__":
    key = jax.random.PRNGKey(0)
    k_logits, k_labels = jax.random.split(key)

    # Small NCHW-shaped example: batch=2, channels=4, spatial=16x16.
    logits = jax.random.normal(k_logits, (2, 4, 16, 16), dtype=jnp.float32)
    labels = (jax.random.uniform(k_labels, (2, 4, 16, 16)) > 0.5).astype(jnp.float32)

    result = bce_with_logits_loss(logits, labels)
    loss = jax.block_until_ready(result["loss"])

    # Pure-JAX reference check (same numerically-stable formula as PyTorch).
    x = logits.astype(jnp.float32)
    y = labels.astype(jnp.float32)
    ref = jnp.mean(jnp.maximum(x, 0.0) - x * y + jnp.log1p(jnp.exp(-jnp.abs(x))))
    assert jnp.allclose(loss, ref, rtol=1e-5, atol=1e-6), (loss, ref)

    print("KERNEL_OK")
</pallas_src>

<mosaic_0001>
module attributes {stable_mosaic.version = 11 : i64} {
  func.func @_bce_partial_kernel(%arg0: i32, %arg1: memref<16x128xf32, #tpu.memory_space<vmem>>, %arg2: memref<16x128xf32, #tpu.memory_space<vmem>>, %arg3: memref<1x8x128xf32, #tpu.memory_space<vmem>>) attributes {dimension_semantics = [#tpu.dimension_semantics<parallel>], iteration_bounds = array<i64: 1>, scalar_prefetch = 0 : i64, scratch_operands = 0 : i64, tpu.core_type = #tpu.core_type<tc>, window_params = [{transform_indices = @transform_0, window_bounds = array<i64: 16, 128>}, {transform_indices = @transform_1, window_bounds = array<i64: 16, 128>}, {transform_indices = @transform_2, window_bounds = array<i64: 1, 8, 128>}]} {
    %c0 = arith.constant 0 : index
    %c0_0 = arith.constant 0 : index
    %0 = vector.load %arg1[%c0, %c0_0] : memref<16x128xf32, #tpu.memory_space<vmem>>, vector<16x128xf32>
    %c0_1 = arith.constant 0 : index
    %c0_2 = arith.constant 0 : index
    %1 = vector.load %arg2[%c0_1, %c0_2] : memref<16x128xf32, #tpu.memory_space<vmem>>, vector<16x128xf32>
    %cst = arith.constant 0.000000e+00 : f32
    %2 = vector.broadcast %cst : f32 to vector<16x128xf32>
    %3 = arith.maximumf %0, %2 : vector<16x128xf32>
    %4 = arith.mulf %0, %1 : vector<16x128xf32>
    %5 = arith.subf %3, %4 : vector<16x128xf32>
    %6 = math.absf %0 : vector<16x128xf32>
    %cst_3 = arith.constant 0.000000e+00 : f32
    %7 = vector.broadcast %cst_3 : f32 to vector<16x128xf32>
    %8 = arith.subf %7, %6 : vector<16x128xf32>
    %9 = math.exp %8 : vector<16x128xf32>
    %10 = math.log1p %9 : vector<16x128xf32>
    %11 = arith.addf %5, %10 : vector<16x128xf32>
    %12 = vector.shape_cast %11 : vector<16x128xf32> to vector<2x8x128xf32>
    %13 = vector.shape_cast %12 : vector<2x8x128xf32> to vector<1x2x8x128xf32>
    %cst_4 = arith.constant dense<0.000000e+00> : vector<1x8x128xf32>
    %14 = vector.multi_reduction <add>, %13, %cst_4 [1] : vector<1x2x8x128xf32> to vector<1x8x128xf32>
    %cst_5 = arith.constant dense<0.000000e+00> : vector<8x128xf32>
    %15 = vector.multi_reduction <add>, %14, %cst_5 [0] : vector<1x8x128xf32> to vector<8x128xf32>
    %c0_6 = arith.constant 0 : index
    %c0_7 = arith.constant 0 : index
    %c0_8 = arith.constant 0 : index
    %16 = vector.load %arg3[%c0_6, %c0_7, %c0_8] : memref<1x8x128xf32, #tpu.memory_space<vmem>>, vector<1x8x128xf32>
    %17 = vector.shape_cast %16 : vector<1x8x128xf32> to vector<8x128xf32>
    %18 = vector.shape_cast %15 : vector<8x128xf32> to vector<1x8x128xf32>
    tpu.vector_store %arg3[%c0_6, %c0_7, %c0_8], %18 {strides = array<i32>} : memref<1x8x128xf32, #tpu.memory_space<vmem>>, vector<1x8x128xf32>,
    return
  }
  func.func @transform_0(%arg0: i32) -> (i32, i32) {
    %c0_i32 = arith.constant 0 : i32
    %c0_i32_0 = arith.constant 0 : i32
    return %arg0, %c0_i32 : i32, i32
  }
  func.func @transform_1(%arg0: i32) -> (i32, i32) {
    %c0_i32 = arith.constant 0 : i32
    %c0_i32_0 = arith.constant 0 : i32
    return %arg0, %c0_i32 : i32, i32
  }
  func.func @transform_2(%arg0: i32) -> (i32, i32, i32) {
    %c0_i32 = arith.constant 0 : i32
    %c0_i32_0 = arith.constant 0 : i32
    %c0_i32_1 = arith.constant 0 : i32
    return %arg0, %c0_i32, %c0_i32_0 : i32, i32, i32
  }
}

</mosaic_0001>

<llo_original>
// kernel: tpu_custom_call.1
$region0: #{tpu_custom_call.1}
  #allocation0 [shape = 'u32[]', space=smem, size = 0x4, offset = 0x4, fixed_abs, tag = 'smem constant byte address 0x4 - core index']
  #allocation1 [shape = 'u32[144,128]{1,0:T(1,128)}', space=vmem, size = 0x12000, scoped, tag = 'internal scratch']
  %s0 = inlined_call_operand.hbm [shape: f32[16,128], index: 0, kind: input, shape index: {}]
  %s1 = inlined_call_operand.hbm [shape: f32[16,128], index: 1, kind: input, shape index: {}]
  %s2 = inlined_call_operand.hbm [shape: f32[1,8,128], index: 2, kind: output, shape index: {}]
  %s3 = sld [smem:[#allocation0]]
  $region26: #{tpu_custom_call.1} parent=0
    _
  %s5 = ssub.s32 1, %s3
  %s6 = scalar_select 0, %s5, %s3
  $region1: #{tpu_custom_call.1} parent=0
    #allocation2 [shape = 'u8[8192]{0}', space=vmem, size = 0x2000, scoped, tag = 'input window, operand 0, single buffered']
    #allocation3 [shape = 's32[1]{0}', space=sflag, size = 0x4, scoped, tag = 'scoped memory for tpu_custom_call.1']
    #allocation4 [shape = 's32[1]{0}', space=sflag, size = 0x4, scoped, tag = 'scoped memory for tpu_custom_call.1']
    #allocation5 [shape = 'u8[8192]{0}', space=vmem, size = 0x2000, scoped, tag = 'input window, operand 1, single buffered']
    #allocation6 [shape = 's32[1]{0}', space=sflag, size = 0x4, scoped, tag = 'scoped memory for tpu_custom_call.1']
    #allocation7 [shape = 'u8[4096]{0}', space=vmem, size = 0x1000, scoped, tag = 'output window, operand 0, single buffered']
    %7 = vsyncpa [#allocation3], 0
    %8 = vsyncpa [#allocation6], 0
    %9 = vsyncpa [#allocation4], 0
    // Predicated region
    $region2: #{tpu_custom_call.1} parent=1 // pred_check
      _
    $region3: #{tpu_custom_call.1} parent=1 // pred_check_branch
      %11 = sbr.rel (0) target = $region5
    $region4: #{tpu_custom_call.1} parent=1 // pred_region
      %s13 = ssub.s32 256, 256
      %14 = vsyncadd [#allocation3], %s13
      %s15 = sshll.u32 [#allocation2], 4
      %s16 = int_to_ptr.vmem [resolvable:$true] %s15
      %21 = dma.hbm_to_vmem [thread:$0]  %s0, 256, %s16, [#allocation3], 128, 128, 8
    $region5: #{tpu_custom_call.1} parent=1 // pred_fallthru
      _
    // Predicated region
    $region6: #{tpu_custom_call.1} parent=1 // pred_check
      _
    $region7: #{tpu_custom_call.1} parent=1 // pred_check_branch
      %23 = sbr.rel (0) target = $region9
    $region8: #{tpu_custom_call.1} parent=1 // pred_region
      %s25 = ssub.s32 256, 256
      %26 = vsyncadd [#allocation6], %s25
      %s27 = sshll.u32 [#allocation5], 4
      %s28 = int_to_ptr.vmem [resolvable:$true] %s27
      %33 = dma.hbm_to_vmem [thread:$0]  %s1, 256, %s28, [#allocation6], 128, 128, 8
    $region9: #{tpu_custom_call.1} parent=1 // pred_fallthru
      _
    // Predicated region
    $region10: #{tpu_custom_call.1} parent=1 // pred_check
      _
    $region11: #{tpu_custom_call.1} parent=1 // pred_check_branch
      %35 = sbr.rel (0) target = $region13
    $region12: #{tpu_custom_call.1} parent=1 // pred_region
      %36 = dma.done [#allocation3], 256
    $region13: #{tpu_custom_call.1} parent=1 // pred_fallthru
      _
    // Predicated region
    $region14: #{tpu_custom_call.1} parent=1 // pred_check
      _
    $region15: #{tpu_custom_call.1} parent=1 // pred_check_branch
      %38 = sbr.rel (0) target = $region17
    $region16: #{tpu_custom_call.1} parent=1 // pred_region
      %39 = dma.done [#allocation6], 256
    $region17: #{tpu_custom_call.1} parent=1 // pred_fallthru
      _
    %v40 = vld [vmem:[#allocation2] sm:$0xff]
    %v41 = vld [vmem:[#allocation2 + $0x8] sm:$0xff]
    %v42 = vld [vmem:[#allocation5] sm:$0xff]
    %v43 = vld [vmem:[#allocation5 + $0x8] sm:$0xff]
    %v44 = vmax.f32 %v40, 0.0
    %v45 = vmax.f32 %v41, 0.0
    %v46 = vmul.f32 %v40, %v42
    %v47 = vmul.f32 %v41, %v43
    %v48 = vsub.f32 %v44, %v46
    %v49 = vsub.f32 %v45, %v47
    %v50 = vand.u32 2147483647, %v40
    %v51 = vand.u32 2147483647, %v41
    %v52 = vsub.f32 0.0, %v50
    %v53 = vsub.f32 0.0, %v51
    %v54 = vmul.f32 %v52, 1.442695
    %v55 = vpow.pop %v54
    %v56 = vmul.f32 %v53, 1.442695
    %v57 = vpow.pop %v56
    %v58 = vadd.f32 %v55, 1.0
    %v59 = vlog2.pop %v58
    %v60 = vmul.f32 %v59, 0.6931472
    %v61 = vmul.f32 -0.5, %v55
    %v62 = vadd.f32 %v61, 1.0
    %v63 = vmul.f32 %v62, %v55
    %v64 = vand.u32 2147483647, %v55
    %vm65 = vcmp.lt.f32.partialorder %v64, 0.0004427343
    %v66 = vsel %vm65, %v63, %v60
    %v67 = vadd.f32 %v57, 1.0
    %v68 = vlog2.pop %v67
    %v69 = vmul.f32 %v68, 0.6931472
    %v70 = vmul.f32 -0.5, %v57
    %v71 = vadd.f32 %v70, 1.0
    %v72 = vmul.f32 %v71, %v57
    %v73 = vand.u32 2147483647, %v57
    %vm74 = vcmp.lt.f32.partialorder %v73, 0.0004427343
    %v75 = vsel %vm74, %v72, %v69
    %v76 = vadd.f32 %v48, %v66
    %v77 = vadd.f32 %v49, %v75
    %v78 = vadd.f32 %v76, %v77
    %v79 = vadd.f32 %v78, 0.0
    %80 = vst [vmem:[#allocation7] sm:$0xff] %v79
    // Predicated region
    $region18: #{tpu_custom_call.1} parent=1 // pred_check
      _
    $region19: #{tpu_custom_call.1} parent=1 // pred_check_branch
      %82 = sbr.rel (0) target = $region21
    $region20: #{tpu_custom_call.1} parent=1 // pred_region
      %s84 = ssub.s32 128, 128
      %85 = vsyncadd [#allocation4], %s84
      %s87 = sshll.u32 [#allocation7], 4
      %s88 = int_to_ptr.vmem [resolvable:$true] %s87
      %90 = dma.vmem_to_hbm [thread:$0]  %s88, 128, %s2, [#allocation4]
    $region21: #{tpu_custom_call.1} parent=1 // pred_fallthru
      _
    // Predicated region
    $region22: #{tpu_custom_call.1} parent=1 // pred_check
      _
    $region23: #{tpu_custom_call.1} parent=1 // pred_check_branch
      %92 = sbr.rel (0) target = $region25
    $region24: #{tpu_custom_call.1} parent=1 // pred_region
      %93 = dma.done [#allocation4], 128
    $region25: #{tpu_custom_call.1} parent=1 // pred_fallthru
      _
    %94 = vsyncpa [#allocation3], 1
    %95 = vsyncpa [#allocation6], 1
    %96 = vsyncpa [#allocation4], 1

</llo_original>
